<compile_context>
chip_gen: v7x
topology: tpu7x:2x2x1
jax: 0.10.0
libtpu: 0.0.40
codegen_flags: <defaults>
</compile_context>

<pallas_src>
import functools
import numpy as np
import jax
import jax.numpy as jnp
from jax.experimental import pallas as pl
from jax.experimental.pallas import tpu as pltpu


# ---------------------------------------------------------------------------
# Constant construction (matches torchaudio defaults: periodic Hann window,
# mel_scale='htk', norm=None, power=1, normalized=False)
# ---------------------------------------------------------------------------
def _hz_to_mel(f):
    return 2595.0 * np.log10(1.0 + np.asarray(f, dtype=np.float64) / 700.0)


def _mel_to_hz(m):
    return 700.0 * (10.0 ** (np.asarray(m, dtype=np.float64) / 2595.0) - 1.0)


def melscale_fbanks(n_freqs, f_min, f_max, n_mels, sample_rate):
    """HTK mel filterbank, norm=None — matches torchaudio.functional.melscale_fbanks."""
    all_freqs = np.linspace(0.0, sample_rate // 2, n_freqs)
    m_pts = np.linspace(_hz_to_mel(f_min), _hz_to_mel(f_max), n_mels + 2)
    f_pts = _mel_to_hz(m_pts)
    f_diff = f_pts[1:] - f_pts[:-1]
    slopes = f_pts[None, :] - all_freqs[:, None]
    down = -slopes[:, :-2] / f_diff[:-1]
    up = slopes[:, 2:] / f_diff[1:]
    fb = np.maximum(0.0, np.minimum(down, up))
    return fb.astype(np.float32)  # (n_freqs, n_mels)


def hann_window(win_length):
    n = np.arange(win_length, dtype=np.float64)
    return 0.5 - 0.5 * np.cos(2.0 * np.pi * n / win_length)  # periodic hann (float64)


# ---------------------------------------------------------------------------
# Pallas kernel: one (frame-tile, batch) block of the mel spectrogram + safe_log
# ---------------------------------------------------------------------------
def _mel_kernel(main_ref, wdft_ref, fb_ref, out_ref, *,
                ratio, n_freqs_pad, f_chunk, clip_val):
    # (hop, TF + ratio - 1) chunked audio; cast to bf16 once so the shifted slices move
    # half the vregs and feed the bf16 MXU matmul directly.
    full = main_ref[0, 0].astype(jnp.bfloat16)
    tf = out_ref.shape[2]
    if ratio > 1:
        # Rebuild the overlapped (n_fft, TF) frame matrix from `ratio` shifted chunk slices
        # (consecutive frames overlap by n_fft - hop samples).
        frames_t = jnp.concatenate([full[:, r:r + tf] for r in range(ratio)], axis=0)
    else:
        frames_t = full                           # already (n_fft, TF)

    # Fused windowed DFT: [win*cos ; win*sin] @ frames -> (2*F, TF), f32 accumulation.
    spec = jnp.dot(wdft_ref[...], frames_t, preferred_element_type=jnp.float32)

    F = n_freqs_pad
    n_mels = fb_ref.shape[0]
    mel = jnp.zeros((n_mels, tf), jnp.float32)
    # Chunk the freq axis so the EUP sqrt of chunk k overlaps the MXU mel-matmul of chunk k-1.
    for f0 in range(0, F, f_chunk):
        f1 = min(f0 + f_chunk, F)
        re = spec[f0:f1, :]
        im = spec[F + f0:F + f1, :]
        mag = jnp.sqrt(re * re + im * im).astype(jnp.bfloat16)  # power=1 magnitude (f32 math)
        mel = mel + jnp.dot(fb_ref[:, f0:f1], mag, preferred_element_type=jnp.float32)

    out_ref[0] = jnp.log(jnp.maximum(mel, clip_val))            # safe_log


# ---------------------------------------------------------------------------
# Wrapper
# ---------------------------------------------------------------------------
def mel_spectrogram_features(
    audio,
    *,
    sample_rate=24000,
    n_fft=1024,
    hop_length=256,
    win_length=None,
    n_mels=100,
    mel_fmin=0.0,
    mel_fmax=None,
    padding="center",
    clip_val=1e-7,
):
    if padding not in ("center", "same"):
        raise ValueError("Padding must be 'center' or 'same'.")
    win_length = win_length or n_fft
    mel_fmax = mel_fmax or sample_rate / 2.0
    n_freqs = n_fft // 2 + 1

    audio = jnp.asarray(audio, dtype=jnp.float32)
    B, L = audio.shape

    # --- padding (PyTorch / torchaudio semantics) ---
    if padding == "same":
        pad = win_length - hop_length
        # matches the module: F.pad(audio, (pad // 2, pad // 2), mode='reflect'), center=False
        audio = jnp.pad(audio, ((0, 0), (pad // 2, pad // 2)), mode="reflect")
    else:  # 'center' -> torch.stft(center=True) reflect-pads n_fft//2 on each side
        # TODO(synk): jnp reflect-pad requires n_fft//2 < L; very short inputs are unsupported.
        audio = jnp.pad(audio, ((0, 0), (n_fft // 2, n_fft // 2)), mode="reflect")

    Lp = audio.shape[1]
    n_frames = 1 + (Lp - n_fft) // hop_length

    # --- per-generation VMEM budget & frame-tile size (lane axis, multiple of 128) ---
    try:
        vmem_cap = int(pltpu.get_tpu_info().vmem_capacity_bytes)
    except Exception:
        vmem_cap = 64 * 1024 * 1024               # assume the smallest (v7x per-TC) budget
    big_vmem = vmem_cap >= 128 * 1024 * 1024      # v5e / v6e
    vmem_limit = (64 if big_vmem else 32) * 1024 * 1024
    if n_fft <= 1024:
        tf_cap = 512
    elif n_fft <= 2048:
        tf_cap = 512 if big_vmem else 256
    else:
        tf_cap = 256 if big_vmem else 128

    lane_blocks = -(-n_frames // 128)
    n_tiles = -(-(lane_blocks * 128) // tf_cap)
    TF = 128 * (-(-lane_blocks // n_tiles))
    n_frames_pad = n_tiles * TF

    # --- chunked-audio input: edges folded into the main block (one DMA stream, ~1x traffic) ---
    if n_fft % hop_length == 0:
        ratio = n_fft // hop_length
        hop_k = hop_length
        W = TF + ratio - 1
        n_chunks = n_frames_pad + ratio - 1
        total = n_chunks * hop_k
        audio_z = jnp.pad(audio, ((0, 0), (0, max(0, total - Lp))))[:, :total]
        chunks = audio_z.reshape(B, n_chunks, hop_k)
        # tile t needs chunks [t*TF, t*TF + W): only (ratio-1)/TF duplicated samples per tile
        cidx = np.arange(n_tiles)[:, None] * TF + np.arange(W)[None, :]
        main = jnp.transpose(chunks[:, cidx], (0, 1, 3, 2))      # (B, n_tiles, hop, W)
    else:
        # TODO(synk): when hop does not divide n_fft we fall back to a host-gathered frame
        # matrix (~n_fft/hop x HBM traffic); the in-kernel math is identical.
        ratio = 1
        hop_k = n_fft
        W = TF
        need = (n_frames_pad - 1) * hop_length + n_fft
        audio_z = jnp.pad(audio, ((0, 0), (0, max(0, need - Lp))))
        fidx = np.arange(n_frames_pad)[:, None] * hop_length + np.arange(n_fft)[None, :]
        framed = audio_z[:, fidx].reshape(B, n_tiles, TF, n_fft)
        main = jnp.transpose(framed, (0, 1, 3, 2))               # (B, n_tiles, n_fft, TF)

    # --- constants: Hann folded into the DFT basis; bf16 for the MXU; freq axis 8-padded ---
    F = ((n_freqs + 7) // 8) * 8
    win = hann_window(win_length)
    if win_length < n_fft:  # torch.stft centers a short window inside n_fft
        lpad = (n_fft - win_length) // 2
        win = np.pad(win, (lpad, n_fft - win_length - lpad))
    ang = 2.0 * np.pi * np.outer(np.arange(n_freqs, dtype=np.float64),
                                 np.arange(n_fft, dtype=np.float64)) / n_fft
    wdft = np.zeros((2 * F, n_fft), np.float32)
    wdft[:n_freqs] = np.cos(ang) * win[None, :]
    wdft[F:F + n_freqs] = np.sin(ang) * win[None, :]
    fbank = melscale_fbanks(n_freqs, mel_fmin, mel_fmax, n_mels, sample_rate)  # (n_freqs, n_mels)
    fb_t = np.zeros((n_mels, F), np.float32)
    fb_t[:, :n_freqs] = fbank.T
    wdft = jnp.asarray(wdft, dtype=jnp.bfloat16)   # bf16 MXU operand (f32 accumulation in-kernel)
    fb_t = jnp.asarray(fb_t, dtype=jnp.bfloat16)

    f_chunk = min(F, 256)
    kernel = functools.partial(_mel_kernel, ratio=ratio, n_freqs_pad=F,
                               f_chunk=f_chunk, clip_val=clip_val)

    out = pl.pallas_call(
        kernel,
        out_shape=jax.ShapeDtypeStruct((B, n_mels, n_frames_pad), jnp.float32),
        grid_spec=pltpu.PrefetchScalarGridSpec(
            num_scalar_prefetch=0,
            grid=(n_tiles, B),     # frame-tile axis first: shards across v7x's two TensorCores
            in_specs=[
                pl.BlockSpec((1, 1, hop_k, W), lambda t, b: (b, t, 0, 0)),
                pl.BlockSpec((2 * F, n_fft), lambda t, b: (0, 0),
                             pipeline_mode=pl.Buffered(1)),       # grid-invariant constant
                pl.BlockSpec((n_mels, F), lambda t, b: (0, 0),
                             pipeline_mode=pl.Buffered(1)),       # grid-invariant constant
            ],
            out_specs=pl.BlockSpec((1, n_mels, TF), lambda t, b: (b, 0, t)),
        ),
        compiler_params=pltpu.CompilerParams(
            dimension_semantics=("parallel", "parallel"),
            vmem_limit_bytes=vmem_limit,
        ),
    )(main, wdft, fb_t)

    # Kernel already emits the PyTorch (B, n_mels, n_frames) layout; just drop frame padding.
    return out[:, :, :n_frames]


if __name__ == "__main__":
    key = jax.random.PRNGKey(0)
    B, L = 2, 256
    sr, n_fft, hop, n_mels = 16000, 64, 16, 16
    audio = jax.random.normal(key, (B, L), dtype=jnp.float32)

    mel = mel_spectrogram_features(
        audio, sample_rate=sr, n_fft=n_fft, hop_length=hop, n_mels=n_mels, padding="center")
    jax.block_until_ready(mel)
    assert mel.shape == (B, n_mels, 1 + L // hop), mel.shape
    assert bool(jnp.all(jnp.isfinite(mel)))

    # numpy reference (gathered frames, explicit windowed DFT) to validate the in-kernel framing.
    a = np.pad(np.asarray(audio, np.float64), ((0, 0), (n_fft // 2, n_fft // 2)), mode="reflect")
    n_frames = 1 + L // hop
    idx = np.arange(n_frames)[:, None] * hop + np.arange(n_fft)[None, :]
    frames = a[:, idx] * hann_window(n_fft)[None, None, :]
    ang = 2.0 * np.pi * np.outer(np.arange(n_fft // 2 + 1), np.arange(n_fft)) / n_fft
    mag = np.sqrt((frames @ np.cos(ang).T) ** 2 + (frames @ np.sin(ang).T) ** 2)
    fb = melscale_fbanks(n_fft // 2 + 1, 0.0, sr / 2.0, n_mels, sr).astype(np.float64)
    ref = np.log(np.maximum(mag @ fb, 1e-7)).transpose(0, 2, 1)
    # bf16 MXU operands cost ~3 decimal digits on the DFT/mel operands -> loosened tolerance.
    np.testing.assert_allclose(np.asarray(mel), ref, rtol=5e-2, atol=5e-2)

    print("KERNEL_OK")
</pallas_src>

<mosaic_0001>
module attributes {stable_mosaic.version = 11 : i64} {
  func.func @_mel_kernel(%arg0: i32, %arg1: i32, %arg2: memref<1x1x16x131xf32, #tpu.memory_space<vmem>>, %arg3: memref<80x64xbf16, #tpu.memory_space<vmem>>, %arg4: memref<16x40xbf16, #tpu.memory_space<vmem>>, %arg5: memref<1x16x128xf32, #tpu.memory_space<vmem>>) attributes {dimension_semantics = [#tpu.dimension_semantics<parallel>, #tpu.dimension_semantics<parallel>], iteration_bounds = array<i64: 1, 2>, scalar_prefetch = 0 : i64, scratch_operands = 0 : i64, tpu.core_type = #tpu.core_type<tc>, window_params = [{transform_indices = @transform_0, window_bounds = array<i64: 1, 1, 16, 131>}, {pipeline_mode = #tpu.pipeline_mode<synchronous>, transform_indices = @transform_1, window_bounds = array<i64: 80, 64>}, {pipeline_mode = #tpu.pipeline_mode<synchronous>, transform_indices = @transform_2, window_bounds = array<i64: 16, 40>}, {transform_indices = @transform_3, window_bounds = array<i64: 1, 16, 128>}]} {
    %c0 = arith.constant 0 : index
    %c0_0 = arith.constant 0 : index
    %c0_1 = arith.constant 0 : index
    %c0_2 = arith.constant 0 : index
    %0 = vector.load %arg2[%c0, %c0_0, %c0_1, %c0_2] : memref<1x1x16x131xf32, #tpu.memory_space<vmem>>, vector<1x1x16x131xf32>
    %1 = vector.shape_cast %0 : vector<1x1x16x131xf32> to vector<16x131xf32>
    %2 = arith.truncf %1 : vector<16x131xf32> to vector<16x131xbf16>
    %3 = vector.extract_strided_slice %2 {offsets = [0, 0], sizes = [16, 128], strides = [1, 1]} : vector<16x131xbf16> to vector<16x128xbf16>
    %4 = vector.extract_strided_slice %2 {offsets = [0, 1], sizes = [16, 128], strides = [1, 1]} : vector<16x131xbf16> to vector<16x128xbf16>
    %5 = vector.extract_strided_slice %2 {offsets = [0, 2], sizes = [16, 128], strides = [1, 1]} : vector<16x131xbf16> to vector<16x128xbf16>
    %6 = vector.extract_strided_slice %2 {offsets = [0, 3], sizes = [16, 128], strides = [1, 1]} : vector<16x131xbf16> to vector<16x128xbf16>
    %7 = tpu.concatenate %3, %4, %5, %6 in 0 : vector<16x128xbf16>, vector<16x128xbf16>, vector<16x128xbf16>, vector<16x128xbf16> -> vector<64x128xbf16>
    %c0_3 = arith.constant 0 : index
    %c0_4 = arith.constant 0 : index
    %8 = vector.load %arg3[%c0_3, %c0_4] : memref<80x64xbf16, #tpu.memory_space<vmem>>, vector<80x64xbf16>
    %cst = arith.constant dense<0.000000e+00> : vector<80x128xf32>
    %9 = tpu.matmul %8, %7, %cst {dimension_numbers = #tpu.dot_dimension_numbers<[1], [0], [0], [1], [0, 0, 1, 1], [], []>} : vector<80x64xbf16>, vector<64x128xbf16>, vector<80x128xf32> -> vector<80x128xf32>
    %cst_5 = arith.constant 0.000000e+00 : f32
    %10 = vector.broadcast %cst_5 : f32 to vector<16x128xf32>
    %11 = vector.extract_strided_slice %9 {offsets = [0, 0], sizes = [40, 128], strides = [1, 1]} : vector<80x128xf32> to vector<40x128xf32>
    %12 = vector.extract_strided_slice %9 {offsets = [40, 0], sizes = [40, 128], strides = [1, 1]} : vector<80x128xf32> to vector<40x128xf32>
    %13 = arith.mulf %11, %11 : vector<40x128xf32>
    %14 = arith.mulf %12, %12 : vector<40x128xf32>
    %15 = arith.addf %13, %14 : vector<40x128xf32>
    %16 = math.sqrt %15 : vector<40x128xf32>
    %17 = arith.truncf %16 : vector<40x128xf32> to vector<40x128xbf16>
    %c0_6 = arith.constant 0 : index
    %c0_7 = arith.constant 0 : index
    %18 = vector.load %arg4[%c0_6, %c0_7] : memref<16x40xbf16, #tpu.memory_space<vmem>>, vector<16x40xbf16>
    %cst_8 = arith.constant dense<0.000000e+00> : vector<16x128xf32>
    %19 = tpu.matmul %18, %17, %cst_8 {dimension_numbers = #tpu.dot_dimension_numbers<[1], [0], [0], [1], [0, 0, 1, 1], [], []>} : vector<16x40xbf16>, vector<40x128xbf16>, vector<16x128xf32> -> vector<16x128xf32>
    %20 = arith.addf %10, %19 : vector<16x128xf32>
    %cst_9 = arith.constant 1.000000e-07 : f32
    %21 = vector.broadcast %cst_9 : f32 to vector<16x128xf32>
    %22 = arith.maximumf %20, %21 : vector<16x128xf32>
    %23 = math.log %22 : vector<16x128xf32>
    %c0_10 = arith.constant 0 : index
    %c0_11 = arith.constant 0 : index
    %c0_12 = arith.constant 0 : index
    %24 = vector.load %arg5[%c0_10, %c0_11, %c0_12] : memref<1x16x128xf32, #tpu.memory_space<vmem>>, vector<1x16x128xf32>
    %25 = vector.shape_cast %24 : vector<1x16x128xf32> to vector<16x128xf32>
    %26 = vector.shape_cast %23 : vector<16x128xf32> to vector<1x16x128xf32>
    tpu.vector_store %arg5[%c0_10, %c0_11, %c0_12], %26 {strides = array<i32>} : memref<1x16x128xf32, #tpu.memory_space<vmem>>, vector<1x16x128xf32>,
    return
  }
  func.func @transform_0(%arg0: i32, %arg1: i32) -> (i32, i32, i32, i32) {
    %c0_i32 = arith.constant 0 : i32
    %c0_i32_0 = arith.constant 0 : i32
    %c0_i32_1 = arith.constant 0 : i32
    return %arg1, %arg0, %c0_i32, %c0_i32_0 : i32, i32, i32, i32
  }
  func.func @transform_1(%arg0: i32, %arg1: i32) -> (i32, i32) {
    %c0_i32 = arith.constant 0 : i32
    %c0_i32_0 = arith.constant 0 : i32
    %c0_i32_1 = arith.constant 0 : i32
    return %c0_i32, %c0_i32_0 : i32, i32
  }
  func.func @transform_2(%arg0: i32, %arg1: i32) -> (i32, i32) {
    %c0_i32 = arith.constant 0 : i32
    %c0_i32_0 = arith.constant 0 : i32
    %c0_i32_1 = arith.constant 0 : i32
    return %c0_i32, %c0_i32_0 : i32, i32
  }
  func.func @transform_3(%arg0: i32, %arg1: i32) -> (i32, i32, i32) {
    %c0_i32 = arith.constant 0 : i32
    %c0_i32_0 = arith.constant 0 : i32
    return %arg1, %c0_i32, %arg0 : i32, i32, i32
  }
}

</mosaic_0001>

<llo_original>
// kernel: tpu_custom_call.1
$region0: #{tpu_custom_call.1}
  #allocation0 [shape = 'u32[]', space=smem, size = 0x4, offset = 0x4, fixed_abs, tag = 'smem constant byte address 0x4 - core index']
  #allocation1 [shape = 'u32[144,128]{1,0:T(1,128)}', space=vmem, size = 0x12000, scoped, tag = 'internal scratch']
  %s0 = inlined_call_operand.vmem [shape: f32[2,1,16,131], index: 0, kind: input, shape index: {}]
  %s1 = inlined_call_operand.vmem [shape: bf16[80,64], index: 1, kind: input, shape index: {}]
  %s2 = inlined_call_operand.vmem [shape: bf16[16,40], index: 2, kind: input, shape index: {}]
  %s3 = inlined_call_operand.hbm [shape: f32[2,16,128], index: 3, kind: output, shape index: {}]
  %s4 = sld [smem:[#allocation0]]
  $region45: #{tpu_custom_call.1} parent=0
    _
  %s6 = ssub.s32 1, %s4
  %s7 = scalar_select 0, %s6, %s4
  $region1: #{tpu_custom_call.1} parent=0
    #allocation2 [shape = 'u8[16384]{0}', space=vmem, size = 0x4000, scoped, tag = 'output window, operand 0']
    #allocation3 [shape = 's32[2]{0}', space=sflag, size = 0x8, scoped, tag = 'scoped memory for tpu_custom_call.1']
    %8 = vsyncpa [#allocation3], 0
    %s9 = scalar_lea.sflag [#allocation3], 1
    %10 = vsyncpa %s9, 0
    loop: start=0, step=1, limit=4
    $region2: #{tpu_custom_call.1} parent=1 // loop_pre_header
      _
    $region3: #{tpu_custom_call.1} parent=1 // loop_header
      %s12 = sphi 0, %s16
      %p13 = scmp.ge.s32.totalorder %s12, 4
      %s19 = sphi 0, %s31
      %s20 = sphi 0, %s27
      %s21 = sphi 0, %s19
      %s22 = sphi 0, %s20
      %s23 = sphi 0, %s21
      %s24 = sphi 0, %s22
      %s36 = sphi 0, %s38
      %s39 = sphi 0, %s36
      %s40 = sphi 0, %s39
      %s56 = sphi 0, %s40
      %s60 = sphi 0, %s60
      %s62 = sphi 0, %s60
      %s63 = sphi 0, %s62
      %s77 = sphi 0, %s63
      %s81 = sphi 0, %s81
      %s83 = sphi 0, %s81
      %s84 = sphi 0, %s83
      %s98 = sphi 0, %s84
      %s106 = sphi 0, %s108
      %s109 = sphi 0, %s106
      %s110 = sphi 0, %s109
      %s126 = sphi 0, %s110
    $region4: #{tpu_custom_call.1} parent=1 // loop_header_branch
      %15 = sbr.rel (%p13) target = $region8
    $region5: #{tpu_custom_call.1} parent=1 // loop_body
      %s17 = ssub.s32 %s12, 1
      %s18 = ssub.s32 %s12, 2
      %s25 = sadd.s32 1, %s20
      %p26 = scmp.ge.s32.totalorder %s25, 2
      %s27 = scalar_select %p26, 0, %s25
      %s28 = sadd.s32 1, %s19
      %s29 = scalar_select %p26, %s28, %s19
      %p30 = scmp.ge.s32.totalorder %s29, 1
      %s31 = scalar_select %p30, 0, %s29
      %s32 = ssub.s32 %s20, %s27
      %s33 = ssub.s32 %s19, %s31
      %s34 = sor.u32 %s32, %s33
      %p35 = scmp.eq.s32.totalorder %s34, 0
      %s37 = sadd.s32 %s36, 1
      %s38 = scalar_select %p35, %s36, %s37
      %p41 = pneg %p35
      %p42 = scmp.eq.s32.totalorder %s12, 1
      %p43 = por %p41, %p42
      %p44 = scmp.ne.s32.totalorder %s36, %s39
      %p45 = scmp.eq.s32.totalorder %s12, 0
      %p46 = por %p44, %p45
      %p47 = scmp.ne.s32.totalorder %s36, %s39
      %p48 = scmp.eq.s32.totalorder %s17, 1
      %p49 = por %p47, %p48
      %p50 = scmp.ne.s32.totalorder %s39, %s40
      %p51 = scmp.eq.s32.totalorder %s17, 0
      %p52 = por %p50, %p51
      %p53 = scmp.ne.s32.totalorder %s39, %s40
      %p54 = scmp.eq.s32.totalorder %s18, 1
      %p55 = por %p53, %p54
      %p57 = scmp.ne.s32.totalorder %s40, %s56
      %p58 = scmp.eq.s32.totalorder %s18, 0
      %p59 = por %p57, %p58
      %s61 = sadd.s32 %s60, 1
      %p64 = scmp.eq.s32.totalorder %s12, 1
      %p65 = scmp.ne.s32.totalorder %s60, %s62
      %p66 = scmp.eq.s32.totalorder %s12, 0
      %p67 = por %p65, %p66
      %p68 = scmp.ne.s32.totalorder %s60, %s62
      %p69 = scmp.eq.s32.totalorder %s17, 1
      %p70 = por %p68, %p69
      %p71 = scmp.ne.s32.totalorder %s62, %s63
      %p72 = scmp.eq.s32.totalorder %s17, 0
      %p73 = por %p71, %p72
      %p74 = scmp.ne.s32.totalorder %s62, %s63
      %p75 = scmp.eq.s32.totalorder %s18, 1
      %p76 = por %p74, %p75
      %p78 = scmp.ne.s32.totalorder %s63, %s77
      %p79 = scmp.eq.s32.totalorder %s18, 0
      %p80 = por %p78, %p79
      %s82 = sadd.s32 %s81, 1
      %p85 = scmp.eq.s32.totalorder %s12, 1
      %p86 = scmp.ne.s32.totalorder %s81, %s83
      %p87 = scmp.eq.s32.totalorder %s12, 0
      %p88 = por %p86, %p87
      %p89 = scmp.ne.s32.totalorder %s81, %s83
      %p90 = scmp.eq.s32.totalorder %s17, 1
      %p91 = por %p89, %p90
      %p92 = scmp.ne.s32.totalorder %s83, %s84
      %p93 = scmp.eq.s32.totalorder %s17, 0
      %p94 = por %p92, %p93
      %p95 = scmp.ne.s32.totalorder %s83, %s84
      %p96 = scmp.eq.s32.totalorder %s18, 1
      %p97 = por %p95, %p96
      %p99 = scmp.ne.s32.totalorder %s84, %s98
      %p100 = scmp.eq.s32.totalorder %s18, 0
      %p101 = por %p99, %p100
      %s102 = ssub.s32 %s20, %s27
      %s103 = ssub.s32 %s19, %s31
      %s104 = sor.u32 %s102, %s103
      %p105 = scmp.eq.s32.totalorder %s104, 0
      %s107 = sadd.s32 %s106, 1
      %s108 = scalar_select %p105, %s106, %s107
      %p111 = pneg %p105
      %p112 = scmp.eq.s32.totalorder %s12, 1
      %p113 = por %p111, %p112
      %p114 = scmp.ne.s32.totalorder %s106, %s109
      %p115 = scmp.eq.s32.totalorder %s12, 0
      %p116 = por %p114, %p115
      %p117 = scmp.ne.s32.totalorder %s106, %s109
      %p118 = scmp.eq.s32.totalorder %s17, 1
      %p119 = por %p117, %p118
      %p120 = scmp.ne.s32.totalorder %s109, %s110
      %p121 = scmp.eq.s32.totalorder %s17, 0
      %p122 = por %p120, %p121
      %p123 = scmp.ne.s32.totalorder %s109, %s110
      %p124 = scmp.eq.s32.totalorder %s18, 1
      %p125 = por %p123, %p124
      %p127 = scmp.ne.s32.totalorder %s110, %s126
      %p128 = scmp.eq.s32.totalorder %s18, 0
      %p129 = por %p127, %p128
      %p130 = scmp.le.s32.totalorder 1, %s12
      %p131 = scmp.lt.s32.totalorder %s12, 3
      %p132 = pnand %p130, %p131
      %p133 = pneg %p132
      // Predicated region
      $region9: #{tpu_custom_call.1} parent=5 // pred_check
        _
      $region10: #{tpu_custom_call.1} parent=5 // pred_check_branch
        %135 = sbr.rel (%p132) target = $region12
      $region11: #{tpu_custom_call.1} parent=5 // pred_region
        %s136 = ssub.s32 %s12, 1
        // Predicated region
        $region13: #{tpu_custom_call.1} parent=11 // pred_check
          %p137 = pneg %p73
        $region14: #{tpu_custom_call.1} parent=11 // pred_check_branch
          %139 = sbr.rel (%p137) target = $region16
        $region15: #{tpu_custom_call.1} parent=11 // pred_region
          _
        $region16: #{tpu_custom_call.1} parent=11 // pred_fallthru
          _
        // Predicated region
        $region17: #{tpu_custom_call.1} parent=11 // pred_check
          %p140 = pneg %p94
        $region18: #{tpu_custom_call.1} parent=11 // pred_check_branch
          %142 = sbr.rel (%p140) target = $region20
        $region19: #{tpu_custom_call.1} parent=11 // pred_region
          _
        $region20: #{tpu_custom_call.1} parent=11 // pred_fallthru
          _
      $region12: #{tpu_custom_call.1} parent=5 // pred_fallthru
        _
      %p143 = scmp.lt.s32.totalorder %s12, 2
      // Predicated region
      $region21: #{tpu_custom_call.1} parent=5 // pred_check
        %p144 = pneg %p143
      $region22: #{tpu_custom_call.1} parent=5 // pred_check_branch
        %146 = sbr.rel (%p144) target = $region24
      $region23: #{tpu_custom_call.1} parent=5 // pred_region
        // Predicated region
        $region25: #{tpu_custom_call.1} parent=23 // pred_check
          %p147 = pneg %p46
        $region26: #{tpu_custom_call.1} parent=23 // pred_check_branch
          %149 = sbr.rel (%p147) target = $region28
        $region27: #{tpu_custom_call.1} parent=23 // pred_region
          %p150 = scmp.lt.s32.totalorder %s20, 1
          %s151 = scalar_select %p150, %s20, 1
          %p152 = scmp.lt.s32.totalorder %s19, 0
          %s153 = scalar_select %p152, %s19, 0
          %s154 = smul.addr %s153, 4
          %s155 = smul.addr %s151, 4
          %s156 = sadd.s32 %s154, %s155
          %s157 = smul.addr %s156, 8
          %s158 = scalar_lea.vmem %s0, %s157
        $region28: #{tpu_custom_call.1} parent=23 // pred_fallthru
          _
      $region24: #{tpu_custom_call.1} parent=5 // pred_fallthru
        _
      %p159 = scmp.le.s32.totalorder 1, %s12
      %p160 = scmp.lt.s32.totalorder %s12, 3
      %p161 = pnand %p159, %p160
      %p162 = pneg %p161
      // Predicated region
      $region29: #{tpu_custom_call.1} parent=5 // pred_check
        _
      $region30: #{tpu_custom_call.1} parent=5 // pred_check_branch
        %164 = sbr.rel (%p161) target = $region32
      $region31: #{tpu_custom_call.1} parent=5 // pred_region
        %s165 = ssub.s32 %s12, 1
        %p166 = scmp.lt.s32.totalorder %s22, 1
        %s167 = scalar_select %p166, %s22, 1
        %p168 = scmp.lt.s32.totalorder %s21, 0
        %s169 = scalar_select %p168, %s21, 0
        %s170 = smul.addr %s169, 4
        %s171 = smul.addr %s167, 4
        %s172 = sadd.s32 %s170, %s171
        %s173 = smul.addr %s172, 8
        %s174 = scalar_lea.vmem %s0, %s173
        %p175 = pneg %p52
        %p176 = pneg %p49
        %p177 = pneg %p73
        %p178 = pneg %p70
        %p179 = pneg %p94
        %p180 = pneg %p91
        %p181 = pneg %p122
        %p182 = pneg %p119
        %s183 = sand.u32 %s109, 1
        %s184 = scalar_lea.sflag [#allocation3], %s183
        %s185 = sand.u32 %s109, 1
        %s186 = smul.addr %s185, 16
        %s187 = scalar_lea.vmem [#allocation2], %s186
        %p188 = scmp.lt.s32.totalorder %s22, 1
        %s189 = scalar_select %p188, %s22, 1
        %p190 = scmp.lt.s32.totalorder %s21, 0
        %s191 = scalar_select %p190, %s21, 0
        %s192 = smul.addr %s191, 4
        %s193 = smul.addr %s189, 4
        %s194 = sadd.s32 %s192, %s193
        %s195 = smul.addr %s194, 8
        %s196 = scalar_lea.vmem %s0, %s195
        %v198 = vld [vmem:[%s196] sm:$0xff]
        %v199 = vld [vmem:[%s196 + $0x8] sm:$0xff]
        %v200 = vld [vmem:[%s196 + $0x10] sm:$0xff]
        %v201 = vld [vmem:[%s196 + $0x18] sm:$0xff]
        %v202 = vpack.c.bf16 %v200, %v198
        %v203 = vpack.c.bf16 %v201, %v199
        %206 = vrot.lane.b32.xlu0 %v202, 127
        %v207 = vpop.permute.xlu0 %206
        %208 = vrot.lane.b32.xlu0 %v203, 127
        %v209 = vpop.permute.xlu0 %208
        %vm210 = vcmask 1039360
        %v211 = vsel %vm210, %v207, %v209
        %213 = vrot.lane.b32.xlu0 %v202, 126
        %v214 = vpop.permute.xlu0 %213
        %215 = vrot.lane.b32.xlu0 %v203, 126
        %v216 = vpop.permute.xlu0 %215
        %vm217 = vcmask 1031168
        %v218 = vsel %vm217, %v214, %v216
        %220 = vrot.lane.b32.xlu0 %v202, 125
        %v221 = vpop.permute.xlu0 %220
        %222 = vrot.lane.b32.xlu0 %v203, 125
        %v223 = vpop.permute.xlu0 %222
        %vm224 = vcmask 1022976
        %v225 = vsel %vm224, %v221, %v223
        %v227 = vld [vmem:[%s1] sm:$0xf]
        %v228 = vld [vmem:[%s1 + $0x4] sm:$0xf]
        %v229 = vld [vmem:[%s1 + $0x8] sm:$0xf]
        %v230 = vld [vmem:[%s1 + $0xc] sm:$0xf]
        %v231 = vld [vmem:[%s1 + $0x10] sm:$0xf]
        %v232 = vld [vmem:[%s1 + $0x14] sm:$0xf]
        %v233 = vld [vmem:[%s1 + $0x18] sm:$0xf]
        %v234 = vld [vmem:[%s1 + $0x1c] sm:$0xf]
        %v235 = vld [vmem:[%s1 + $0x20] sm:$0xf]
        %v236 = vld [vmem:[%s1 + $0x24] sm:$0xf]
        %v247 = vunpack.c.l.b16 %v227
        %v248 = vunpack.c.l.b16 %v228
        %v249 = vunpack.c.l.b16 %v229
        %v250 = vunpack.c.l.b16 %v230
        %v251 = vunpack.c.l.b16 %v231
        %v252 = vunpack.c.l.b16 %v232
        %v253 = vunpack.c.l.b16 %v233
        %v254 = vunpack.c.l.b16 %v234
        %v255 = vunpack.c.l.b16 %v235
        %v256 = vunpack.c.l.b16 %v236
        %v257 = vpack.c.b16 %v248, %v247
        %v258 = vpack.c.b16 %v250, %v249
        %v259 = vpack.c.b16 %v252, %v251
        %v260 = vpack.c.b16 %v254, %v253
        %v261 = vpack.c.b16 %v256, %v255
        %vm262 = vcmask 523264
        %v264 = vsel %vm262, %v257, 0
        %v267 = vsel %vm262, %v258, 0
        %v270 = vsel %vm262, %v259, 0
        %v273 = vsel %vm262, %v260, 0
        %v276 = vsel %vm262, %v261, 0
        %278 = vmatprep.subr.bf16.mxu0 0
        %279 = vmatpush1.bf16.msra.mxu0 %v202
        %280 = vmatprep.subr.bf16.mxu0 0
        %281 = vmatpush1.bf16.msra.mxu0 %v211
        %282 = vmatprep.subr.bf16.mxu0 0
        %283 = vmatpush1.bf16.msra.mxu0 %v218
        %284 = vmatprep.subr.bf16.mxu0 0
        %285 = vmatpush1.bf16.msra.mxu0 %v225
        %286 = vmatprep.subr.bf16.mxu0 0
        %287 = vmatpush1.bf16.msra.mxu0 0
        %288 = vmatprep.subr.bf16.mxu0 0
        %289 = vmatpush1.bf16.msra.mxu0 0
        %290 = vmatprep.subr.bf16.mxu0 0
        %291 = vmatpush1.bf16.msra.mxu0 0
        %292 = vmatprep.subr.bf16.mxu0 0
        %293 = vmatpush1.bf16.msra.mxu0 0
        %294 = vmatprep.subr.bf16.mxu0 0
        %295 = vmatpush1.bf16.msra.mxu0 0
        %296 = vmatprep.subr.bf16.mxu0 0
        %297 = vmatpush1.bf16.msra.mxu0 0
        %298 = vmatprep.subr.bf16.mxu0 0
        %299 = vmatpush1.bf16.msra.mxu0 0
        %300 = vmatprep.subr.bf16.mxu0 0
        %301 = vmatpush1.bf16.msra.mxu0 0
        %302 = vmatprep.subr.bf16.mxu0 0
        %303 = vmatpush1.bf16.msra.mxu0 0
        %304 = vmatprep.subr.bf16.mxu0 0
        %305 = vmatpush1.bf16.msra.mxu0 0
        %306 = vmatprep.subr.bf16.mxu0 0
        %307 = vmatpush1.bf16.msra.mxu0 0
        %308 = vmatprep.subr.bf16.mxu0 0
        %309 = vmatpush1.bf16.msra.mxu0 0
        %310 = vmatprep.mubr.bf16.mxu0 0
        %311 = vmatmul.mubr.bf16.gmra.mrb[0].mxu0 %v264
        %v312 = vpop.f32.mrb[0].mxu0
        %v313 = vadd.f32 0.0, %v312
        %v314 = vpop.f32.mrb[0].mxu0
        %v315 = vpop.f32.mrb[0].mxu0
        %v316 = vadd.f32 0.0, %v315
        %v317 = vpop.f32.mrb[0].mxu0
        %318 = vmatprep.mubr.bf16.mxu0 0
        %319 = vmatmul.mubr.bf16.gmra.mrb[0].mxu0 %v267
        %v320 = vpop.f32.mrb[0].mxu0
        %v321 = vadd.f32 0.0, %v320
        %v322 = vpop.f32.mrb[0].mxu0
        %v323 = vpop.f32.mrb[0].mxu0
        %v324 = vadd.f32 0.0, %v323
        %v325 = vpop.f32.mrb[0].mxu0
        %326 = vmatprep.mubr.bf16.mxu0 0
        %327 = vmatmul.mubr.bf16.gmra.mrb[0].mxu0 %v270
        %v328 = vpop.f32.mrb[0].mxu0
        %v329 = vadd.f32 0.0, %v328
        %v330 = vpop.f32.mrb[0].mxu0
        %v331 = vpop.f32.mrb[0].mxu0
        %v332 = vadd.f32 0.0, %v331
        %v333 = vpop.f32.mrb[0].mxu0
        %334 = vmatprep.mubr.bf16.mxu0 0
        %335 = vmatmul.mubr.bf16.gmra.mrb[0].mxu0 %v273
        %v336 = vpop.f32.mrb[0].mxu0
        %v337 = vadd.f32 0.0, %v336
        %v338 = vpop.f32.mrb[0].mxu0
        %v339 = vpop.f32.mrb[0].mxu0
        %v340 = vadd.f32 0.0, %v339
        %v341 = vpop.f32.mrb[0].mxu0
        %342 = vmatprep.mubr.bf16.mxu0 0
        %343 = vmatmul.mubr.bf16.gmra.mrb[0].mxu0 %v276
        %v344 = vpop.f32.mrb[0].mxu0
        %v345 = vadd.f32 0.0, %v344
        %v346 = vpop.f32.mrb[0].mxu0
        %v347 = vpop.f32.mrb[0].mxu0
        %v348 = vadd.f32 0.0, %v347
        %v349 = vpop.f32.mrb[0].mxu0
        %350 = vdwg.mxu0
        %v351 = vmul.f32 %v313, %v313
        %v352 = vmul.f32 %v316, %v316
        %v353 = vmul.f32 %v321, %v321
        %v354 = vmul.f32 %v324, %v324
        %v355 = vmul.f32 %v329, %v329
        %v356 = vmul.f32 %v332, %v332
        %v357 = vmul.f32 %v337, %v337
        %v358 = vmul.f32 %v340, %v340
        %v359 = vmul.f32 %v345, %v345
        %v360 = vmul.f32 %v348, %v348
        %v361 = vadd.f32 %v351, %v356
        %v362 = vadd.f32 %v352, %v357
        %v363 = vadd.f32 %v353, %v358
        %v364 = vadd.f32 %v354, %v359
        %v365 = vadd.f32 %v355, %v360
        %v366 = vrsqrt.pop %v361
        %v367 = vmul.f32 %v361, %v366
        %vm368 = vcmp.eq.f32.partialorder %v361, inf
        %v369 = vsel %vm368, %v361, %v367
        %vm370 = vcmp.eq.f32.partialorder %v361, 0.0
        %v371 = vand.u32 %v361, 2147483648
        %v372 = vsel %vm370, %v371, %v369
        %v373 = vrsqrt.pop %v362
        %v374 = vmul.f32 %v362, %v373
        %vm375 = vcmp.eq.f32.partialorder %v362, inf
        %v376 = vsel %vm375, %v362, %v374
        %vm377 = vcmp.eq.f32.partialorder %v362, 0.0
        %v378 = vand.u32 %v362, 2147483648
        %v379 = vsel %vm377, %v378, %v376
        %v380 = vrsqrt.pop %v363
        %v381 = vmul.f32 %v363, %v380
        %vm382 = vcmp.eq.f32.partialorder %v363, inf
        %v383 = vsel %vm382, %v363, %v381
        %vm384 = vcmp.eq.f32.partialorder %v363, 0.0
        %v385 = vand.u32 %v363, 2147483648
        %v386 = vsel %vm384, %v385, %v383
        %v387 = vrsqrt.pop %v364
        %v388 = vmul.f32 %v364, %v387
        %vm389 = vcmp.eq.f32.partialorder %v364, inf
        %v390 = vsel %vm389, %v364, %v388
        %vm391 = vcmp.eq.f32.partialorder %v364, 0.0
        %v392 = vand.u32 %v364, 2147483648
        %v393 = vsel %vm391, %v392, %v390
        %v394 = vrsqrt.pop %v365
        %v395 = vmul.f32 %v365, %v394
        %vm396 = vcmp.eq.f32.partialorder %v365, inf
        %v397 = vsel %vm396, %v365, %v395
        %vm398 = vcmp.eq.f32.partialorder %v365, 0.0
        %v399 = vand.u32 %v365, 2147483648
        %v400 = vsel %vm398, %v399, %v397
        %v401 = vpack.c.bf16 %v379, %v372
        %v402 = vpack.c.bf16 %v393, %v386
        %v403 = vpack.c.bf16 %v400, %v400
        %v404 = vld [vmem:[%s2] sm:$0xf]
        %v405 = vld [vmem:[%s2 + $0x4] sm:$0xf]
        %v408 = vunpack.c.l.b16 %v404
        %v409 = vunpack.c.l.b16 %v405
        %v410 = vpack.c.b16 %v409, %v408
        %vm411 = vcmask 326656
        %v413 = vsel %vm411, %v410, 0
        %vm415 = vcmask 1043456
        %v417 = vsel %vm415, %v403, 0
        %419 = vmatprep.subr.bf16.mxu0 0
        %420 = vmatpush1.bf16.msra.mxu0 %v401
        %421 = vmatprep.subr.bf16.mxu0 0
        %422 = vmatpush1.bf16.msra.mxu0 %v402
        %423 = vmatprep.subr.bf16.mxu0 0
        %424 = vmatpush1.bf16.msra.mxu0 %v417
        %425 = vmatprep.subr.bf16.mxu0 0
        %426 = vmatpush1.bf16.msra.mxu0 0
        %427 = vmatprep.subr.bf16.mxu0 0
        %428 = vmatpush1.bf16.msra.mxu0 0
        %429 = vmatprep.subr.bf16.mxu0 0
        %430 = vmatpush1.bf16.msra.mxu0 0
        %431 = vmatprep.subr.bf16.mxu0 0
        %432 = vmatpush1.bf16.msra.mxu0 0
        %433 = vmatprep.subr.bf16.mxu0 0
        %434 = vmatpush1.bf16.msra.mxu0 0
        %435 = vmatprep.subr.bf16.mxu0 0
        %436 = vmatpush1.bf16.msra.mxu0 0
        %437 = vmatprep.subr.bf16.mxu0 0
        %438 = vmatpush1.bf16.msra.mxu0 0
        %439 = vmatprep.subr.bf16.mxu0 0
        %440 = vmatpush1.bf16.msra.mxu0 0
        %441 = vmatprep.subr.bf16.mxu0 0
        %442 = vmatpush1.bf16.msra.mxu0 0
        %443 = vmatprep.subr.bf16.mxu0 0
        %444 = vmatpush1.bf16.msra.mxu0 0
        %445 = vmatprep.subr.bf16.mxu0 0
        %446 = vmatpush1.bf16.msra.mxu0 0
        %447 = vmatprep.subr.bf16.mxu0 0
        %448 = vmatpush1.bf16.msra.mxu0 0
        %449 = vmatprep.subr.bf16.mxu0 0
        %450 = vmatpush1.bf16.msra.mxu0 0
        %451 = vmatprep.mubr.bf16.mxu0 0
        %452 = vmatmul.mubr.bf16.gmra.mrb[0].mxu0 %v413
        %v453 = vpop.f32.mrb[0].mxu0
        %v454 = vadd.f32 0.0, %v453
        %v455 = vpop.f32.mrb[0].mxu0
        %v456 = vpop.f32.mrb[0].mxu0
        %v457 = vadd.f32 0.0, %v456
        %v458 = vpop.f32.mrb[0].mxu0
        %459 = vdwg.mxu0
        %v460 = vmax.f32 %v454, 1e-07
        %v461 = vmax.f32 %v457, 1e-07
        %v462 = vlog2.pop %v460
        %v463 = vmul.f32 %v462, 0.6931472
        %v464 = vlog2.pop %v461
        %v465 = vmul.f32 %v464, 0.6931472
        %466 = vst [vmem:[%s187] sm:$0xff] %v463
        %467 = vst [vmem:[%s187 + $0x8] sm:$0xff] %v465
        %s468 = sand.u32 %s109, 1
        %s469 = scalar_lea.sflag [#allocation3], %s468
        %s470 = sand.u32 %s109, 1
        %s471 = smul.addr %s470, 16
        %s472 = scalar_lea.vmem [#allocation2], %s471
        // Predicated region
        $region33: #{tpu_custom_call.1} parent=31 // pred_check
          %p473 = pneg %p119
        $region34: #{tpu_custom_call.1} parent=31 // pred_check_branch
          %475 = sbr.rel (%p473) target = $region36
        $region35: #{tpu_custom_call.1} parent=31 // pred_region
          %s477 = ssub.s32 256, 256
          %478 = vsyncadd %s469, %s477
          %s479 = smul.addr %s22, 2
          %s480 = sadd.s32 %s21, %s479
          %s481 = smul.addr %s480, 128
          %s482 = scalar_lea.hbm %s3, %s481
          %s483 = sshll.u32 %s472, 4
          %s484 = int_to_ptr.vmem [resolvable:$true] %s483
          %489 = dma.vmem_to_hbm [thread:$0]  %s484, 256, %s482, %s469, 128, 128, 8
        $region36: #{tpu_custom_call.1} parent=31 // pred_fallthru
          _
      $region32: #{tpu_custom_call.1} parent=5 // pred_fallthru
        _
      %p490 = scmp.le.s32.totalorder 2, %s12
      // Predicated region
      $region37: #{tpu_custom_call.1} parent=5 // pred_check
        %p491 = pneg %p490
      $region38: #{tpu_custom_call.1} parent=5 // pred_check_branch
        %493 = sbr.rel (%p491) target = $region40
      $region39: #{tpu_custom_call.1} parent=5 // pred_region
        %s494 = ssub.s32 %s12, 2
        // Predicated region
        $region41: #{tpu_custom_call.1} parent=39 // pred_check
          %p495 = pneg %p125
        $region42: #{tpu_custom_call.1} parent=39 // pred_check_branch
          %497 = sbr.rel (%p495) target = $region44
        $region43: #{tpu_custom_call.1} parent=39 // pred_region
          %s498 = sand.u32 %s110, 1
          %s499 = scalar_lea.sflag [#allocation3], %s498
          %s500 = sand.u32 %s110, 1
          %s501 = smul.addr %s500, 16
          %s502 = scalar_lea.vmem [#allocation2], %s501
          %503 = dma.done %s499, 256
        $region44: #{tpu_custom_call.1} parent=39 // pred_fallthru
          _
      $region40: #{tpu_custom_call.1} parent=5 // pred_fallthru
        _
    $region6: #{tpu_custom_call.1} parent=1 // loop_footer
      %s16 = sadd.s32 1, %s12
    $region7: #{tpu_custom_call.1} parent=1 // loop_footer_branch
      %11 = sbr.rel target = $region3
    $region8: #{tpu_custom_call.1} parent=1 // loop_exit
      _
    %504 = vsyncpa [#allocation3], 1
    %s505 = scalar_lea.sflag [#allocation3], 1
    %506 = vsyncpa %s505, 1

</llo_original>
